<compile_context>
chip_gen: v7x
topology: tpu7x:2x2x1
jax: 0.10.0
libtpu: 0.0.40
codegen_flags: <defaults>
</compile_context>

<pallas_src>
import functools

import jax
import jax.numpy as jnp
import numpy as np
from jax import lax
from jax.experimental import pallas as pl
from jax.experimental.pallas import tpu as pltpu


def _dice_kernel(apply_softmax, n_chunks, chunk, tp, p_valid, n_tiles,
                 score_ref, labels_ref, int_ref, z_ref, y_ref):
    """One grid step = one (C, tp) score tile of one batch element.

    Per-class partial sums are carried in registers across the chunk loop and
    written to the (C, chunk) output block exactly once at the end.
    """
    C = int_ref.shape[0]
    t = pl.program_id(1)
    has_tail = (p_valid % tp) != 0                                  # compile-time

    # Hoisted loop-invariant iotas (JAX does not CSE broadcasts).
    cls = lax.broadcasted_iota(jnp.int32, (C, chunk), 0)
    lane = lax.broadcasted_iota(jnp.int32, (1, chunk), 1) if has_tail else None

    def chunk_body(start, acc, masked):
        i_acc, z_acc, y_acc = acc
        sc = score_ref[:, pl.ds(start, chunk)].astype(jnp.float32)   # (C, chunk)
        lb = labels_ref[:, pl.ds(start, chunk)].astype(jnp.int32)    # (1, chunk)
        if apply_softmax:
            # Per-pixel softmax over the class (sublane) axis: XLU max/sum,
            # EUP exp + approximate reciprocal — keeps the VALU free.
            m = jnp.max(sc, axis=0, keepdims=True)
            e = jnp.exp(sc - m)
            den = jnp.sum(e, axis=0, keepdims=True)
            sc = e * pl.reciprocal(den, approx=True)
        if masked:
            # Ragged last block: out-of-bounds lanes hold unspecified data.
            # Mask with a select AFTER softmax so NaN/Inf can't propagate.
            pix = t * tp + start + lane
            valid = pix < p_valid
            sc = jnp.where(valid, sc, 0.0)
            lb = jnp.where(valid, lb, -1)
        hit = lb == cls                                              # (C, chunk)
        return (i_acc + jnp.where(hit, sc, 0.0),
                z_acc + sc * sc,
                y_acc + jnp.where(hit, 1.0, 0.0))

    def run(masked):
        zero = jnp.zeros((C, chunk), jnp.float32)
        acc = (zero, zero, zero)
        if n_chunks == 1:
            acc = chunk_body(0, acc, masked)
        else:
            acc = lax.fori_loop(
                0, n_chunks,
                lambda s, a: chunk_body(pl.multiple_of(s * chunk, chunk), a,
                                        masked),
                acc, unroll=2)
        int_ref[...], z_ref[...], y_ref[...] = acc

    if not has_tail:
        run(False)                      # every tile is full — no masking at all
    elif n_tiles == 1:
        run(True)                       # single (ragged) tile
    else:
        @pl.when(t == n_tiles - 1)
        def _tail():
            run(True)

        @pl.when(t != n_tiles - 1)
        def _full():
            run(False)


def _vmem_limit_bytes():
    """Generation-aware scoped-VMEM limit (~3/4 of physical, capped at 96 MiB)."""
    cap = 128 * 1024 * 1024
    try:
        cap = int(pltpu.get_tpu_info().vmem_capacity_bytes)
    except Exception:
        pass
    # 128 MiB (v5e/v6e) -> 96 MiB ; 64 MiB (v7x) -> 48 MiB.
    return int(min(max(cap * 3 // 4, 32 * 1024 * 1024), 96 * 1024 * 1024))


def _choose_tiles(n_classes, p, score_itemsize, vmem_limit, block_pixels=None):
    """Pick (pixel tile tp, inner chunk = accumulator lane width)."""
    p128 = ((p + 127) // 128) * 128
    # Inner chunk: keep the 3 f32 (C, chunk) register accumulators plus the
    # unroll=2 working set comfortably inside the 64-vreg file.
    chunk = max(128, min(512, (4096 // max(n_classes, 1)) // 128 * 128))
    chunk = min(chunk, p128)
    p_ceil = ((p + chunk - 1) // chunk) * chunk
    if block_pixels is not None:
        tp = max(chunk, (block_pixels // chunk) * chunk)
    else:
        # Double-buffered input budget: large enough that per-step DMA time
        # dwarfs the ~0.35 us per-step pipeline overhead on every generation
        # (incl. v7x @ ~3.2 TB/s HBM), small enough to leave headroom under
        # the scoped-VMEM limit (64 MiB physical on v7x).
        bytes_per_pixel = n_classes * score_itemsize + 4   # score + int32 label
        budget = min(20 * 1024 * 1024, max(vmem_limit // 2, 4 * 1024 * 1024))
        tp = (budget // (2 * bytes_per_pixel)) // chunk * chunk
    tp = max(chunk, min(tp, p_ceil))                       # no blow-up on tiny inputs
    return tp, chunk


def dice_loss(inputs, target, n_classes, weight=None, softmax=False,
              block_pixels=None):
    """Pallas equivalent of DiceLoss.forward.

    inputs : (N, C, H, W) float logits/probabilities  (NCHW, like PyTorch)
    target : (N, H, W)    integer class labels
    """
    N, C, H, W = inputs.shape
    assert C == n_classes
    P = H * W

    vmem_limit = _vmem_limit_bytes()
    tp, chunk = _choose_tiles(C, P, jnp.dtype(inputs.dtype).itemsize,
                              vmem_limit, block_pixels)
    n_chunks = tp // chunk
    n_tiles = (P + tp - 1) // tp

    # Free reshapes only — no HBM transpose, no jnp.pad, keep the input dtype.
    score = inputs.reshape(N, C, P)
    # Keep labels narrow: int32 (a no-op when the producer already emits int32).
    # TODO(synk): stream int8/int16 labels straight through when the producer
    # provides them (compare against a matching-width iota in-kernel).
    labels = target.reshape(N, 1, P)
    if labels.dtype != jnp.int32:
        labels = labels.astype(jnp.int32)

    grid = (N, n_tiles)
    kernel = functools.partial(_dice_kernel, softmax, n_chunks, chunk, tp, P,
                               n_tiles)

    part_shape = jax.ShapeDtypeStruct((N, n_tiles, C, chunk), jnp.float32)
    out_spec = pl.BlockSpec((None, None, C, chunk), lambda b, t: (b, t, 0, 0))

    intersect, z_sum, y_sum = pl.pallas_call(
        kernel,
        out_shape=(part_shape, part_shape, part_shape),
        grid_spec=pltpu.PrefetchScalarGridSpec(
            num_scalar_prefetch=0,
            grid=grid,
            in_specs=[
                pl.BlockSpec((None, C, tp), lambda b, t: (b, 0, t)),  # score tile
                pl.BlockSpec((None, 1, tp), lambda b, t: (b, 0, t)),  # label tile
            ],
            out_specs=(out_spec, out_spec, out_spec),
        ),
        compiler_params=pltpu.CompilerParams(
            # Every grid step writes its own output block, so both axes are
            # parallel — a v7x chip uses both TensorCores even when N == 1.
            dimension_semantics=("parallel", "parallel"),
            vmem_limit_bytes=vmem_limit,
        ),
    )(score, labels)

    # Tiny epilogue in plain JAX: one cross-lane reduce + dice formula.
    if weight is None:
        weight = [1.0] * n_classes
    w = jnp.asarray(weight, dtype=jnp.float32)
    inter = jnp.sum(intersect, axis=(0, 1, 3))   # (C,)
    z = jnp.sum(z_sum, axis=(0, 1, 3))           # (C,)
    y = jnp.sum(y_sum, axis=(0, 1, 3))           # (C,)
    smooth = 1e-5
    dice = 1.0 - (2.0 * inter + smooth) / (z + y + smooth)
    return jnp.sum(dice * w) / n_classes


def dice_loss_ref(inputs, target, n_classes, weight=None, softmax=False):
    """Pure-JAX reference mirroring the PyTorch module."""
    if softmax:
        inputs = jax.nn.softmax(inputs, axis=1)
    onehot = jax.nn.one_hot(target, n_classes, axis=1, dtype=jnp.float32)
    if weight is None:
        weight = [1.0] * n_classes
    smooth = 1e-5
    loss = 0.0
    for i in range(n_classes):
        s = inputs[:, i]
        t = onehot[:, i]
        intersect = jnp.sum(s * t)
        y_sum = jnp.sum(t * t)
        z_sum = jnp.sum(s * s)
        dice = 1.0 - (2.0 * intersect + smooth) / (z_sum + y_sum + smooth)
        loss = loss + dice * weight[i]
    return loss / n_classes


if __name__ == "__main__":
    key = jax.random.PRNGKey(0)

    cases = [
        # (shape, softmax, block_pixels, rtol, atol)
        ((2, 4, 16, 16), True, None, 5e-3, 1e-4),    # softmax path (approx recip)
        ((2, 4, 16, 16), False, None, 1e-4, 1e-5),   # raw-score path, exact
        ((1, 3, 20, 13), True, None, 5e-3, 1e-4),    # ragged tail, odd C, N == 1
        ((1, 4, 96, 96), False, 2048, 1e-4, 1e-5),   # multi-tile + tail masking
    ]
    for idx, (shape, use_softmax, bp, rtol, atol) in enumerate(cases):
        N, C, H, W = shape
        k_in, k_tg = jax.random.split(jax.random.fold_in(key, idx))
        inputs = jax.random.normal(k_in, shape, dtype=jnp.float32)
        target = jax.random.randint(k_tg, (N, H, W), 0, C, dtype=jnp.int32)

        loss = jax.block_until_ready(
            dice_loss(inputs, target, n_classes=C, softmax=use_softmax,
                      block_pixels=bp))
        ref = jax.block_until_ready(
            dice_loss_ref(inputs, target, n_classes=C, softmax=use_softmax))
        assert np.allclose(np.asarray(loss), np.asarray(ref),
                           rtol=rtol, atol=atol), (
            f"case {idx} {shape} softmax={use_softmax}: "
            f"pallas={float(loss)} ref={float(ref)}")

    print("KERNEL_OK")
</pallas_src>

<mosaic_0001>
module attributes {stable_mosaic.version = 11 : i64} {
  func.func @_dice_kernel(%arg0: i32, %arg1: i32, %arg2: memref<1x4x256xf32, #tpu.memory_space<vmem>>, %arg3: memref<1x1x256xi32, #tpu.memory_space<vmem>>, %arg4: memref<1x1x4x256xf32, #tpu.memory_space<vmem>>, %arg5: memref<1x1x4x256xf32, #tpu.memory_space<vmem>>, %arg6: memref<1x1x4x256xf32, #tpu.memory_space<vmem>>) attributes {dimension_semantics = [#tpu.dimension_semantics<parallel>, #tpu.dimension_semantics<parallel>], iteration_bounds = array<i64: 2, 1>, scalar_prefetch = 0 : i64, scratch_operands = 0 : i64, tpu.core_type = #tpu.core_type<tc>, window_params = [{transform_indices = @transform_0, window_bounds = array<i64: 1, 4, 256>}, {transform_indices = @transform_1, window_bounds = array<i64: 1, 1, 256>}, {transform_indices = @transform_2, window_bounds = array<i64: 1, 1, 4, 256>}, {transform_indices = @transform_3, window_bounds = array<i64: 1, 1, 4, 256>}, {transform_indices = @transform_4, window_bounds = array<i64: 1, 1, 4, 256>}]} {
    %0 = tpu.iota {dimensions = array<i32: 0>} : vector<4x256xi32>
    %cst = arith.constant 0.000000e+00 : f32
    %1 = vector.broadcast %cst : f32 to vector<4x256xf32>
    %c0 = arith.constant 0 : index
    %c0_0 = arith.constant 0 : index
    %c0_1 = arith.constant 0 : index
    %2 = vector.load %arg2[%c0, %c0_0, %c0_1] : memref<1x4x256xf32, #tpu.memory_space<vmem>>, vector<1x4x256xf32>
    %3 = vector.shape_cast %2 : vector<1x4x256xf32> to vector<4x256xf32>
    %c0_2 = arith.constant 0 : index
    %c0_3 = arith.constant 0 : index
    %c0_4 = arith.constant 0 : index
    %4 = vector.load %arg3[%c0_2, %c0_3, %c0_4] : memref<1x1x256xi32, #tpu.memory_space<vmem>>, vector<1x1x256xi32>
    %5 = vector.shape_cast %4 : vector<1x1x256xi32> to vector<1x256xi32>
    %cst_5 = arith.constant dense<0xFF800000> : vector<256xf32>
    %6 = vector.multi_reduction <maximumf>, %3, %cst_5 [0] : vector<4x256xf32> to vector<256xf32>
    %7 = vector.shape_cast %6 : vector<256xf32> to vector<1x256xf32>
    %8 = vector.broadcast %7 : vector<1x256xf32> to vector<4x256xf32>
    %9 = arith.subf %3, %8 : vector<4x256xf32>
    %10 = math.exp %9 : vector<4x256xf32>
    %cst_6 = arith.constant dense<0.000000e+00> : vector<256xf32>
    %11 = vector.multi_reduction <add>, %10, %cst_6 [0] : vector<4x256xf32> to vector<256xf32>
    %12 = vector.shape_cast %11 : vector<256xf32> to vector<1x256xf32>
    %13 = tpu.reciprocal %12 {approx = true} : vector<1x256xf32> -> vector<1x256xf32>
    %14 = vector.broadcast %13 : vector<1x256xf32> to vector<4x256xf32>
    %15 = arith.mulf %10, %14 : vector<4x256xf32>
    %16 = vector.broadcast %5 : vector<1x256xi32> to vector<4x256xi32>
    %17 = arith.cmpi eq, %16, %0 : vector<4x256xi32>
    %cst_7 = arith.constant 0.000000e+00 : f32
    %18 = vector.broadcast %cst_7 : f32 to vector<4x256xf32>
    %19 = arith.select %17, %15, %18 : vector<4x256xi1>, vector<4x256xf32>
    %20 = arith.addf %1, %19 : vector<4x256xf32>
    %21 = arith.mulf %15, %15 : vector<4x256xf32>
    %22 = arith.addf %1, %21 : vector<4x256xf32>
    %cst_8 = arith.constant 1.000000e+00 : f32
    %cst_9 = arith.constant 0.000000e+00 : f32
    %23 = vector.broadcast %cst_8 : f32 to vector<4x256xf32>
    %24 = vector.broadcast %cst_9 : f32 to vector<4x256xf32>
    %25 = arith.select %17, %23, %24 : vector<4x256xi1>, vector<4x256xf32>
    %26 = arith.addf %1, %25 : vector<4x256xf32>
    %c0_10 = arith.constant 0 : index
    %c0_11 = arith.constant 0 : index
    %c0_12 = arith.constant 0 : index
    %c0_13 = arith.constant 0 : index
    %27 = vector.load %arg4[%c0_10, %c0_11, %c0_12, %c0_13] : memref<1x1x4x256xf32, #tpu.memory_space<vmem>>, vector<1x1x4x256xf32>
    %28 = vector.shape_cast %27 : vector<1x1x4x256xf32> to vector<4x256xf32>
    %29 = vector.shape_cast %20 : vector<4x256xf32> to vector<1x1x4x256xf32>
    tpu.vector_store %arg4[%c0_10, %c0_11, %c0_12, %c0_13], %29 {strides = array<i32>} : memref<1x1x4x256xf32, #tpu.memory_space<vmem>>, vector<1x1x4x256xf32>,
    %c0_14 = arith.constant 0 : index
    %c0_15 = arith.constant 0 : index
    %c0_16 = arith.constant 0 : index
    %c0_17 = arith.constant 0 : index
    %30 = vector.load %arg5[%c0_14, %c0_15, %c0_16, %c0_17] : memref<1x1x4x256xf32, #tpu.memory_space<vmem>>, vector<1x1x4x256xf32>
    %31 = vector.shape_cast %30 : vector<1x1x4x256xf32> to vector<4x256xf32>
    %32 = vector.shape_cast %22 : vector<4x256xf32> to vector<1x1x4x256xf32>
    tpu.vector_store %arg5[%c0_14, %c0_15, %c0_16, %c0_17], %32 {strides = array<i32>} : memref<1x1x4x256xf32, #tpu.memory_space<vmem>>, vector<1x1x4x256xf32>,
    %c0_18 = arith.constant 0 : index
    %c0_19 = arith.constant 0 : index
    %c0_20 = arith.constant 0 : index
    %c0_21 = arith.constant 0 : index
    %33 = vector.load %arg6[%c0_18, %c0_19, %c0_20, %c0_21] : memref<1x1x4x256xf32, #tpu.memory_space<vmem>>, vector<1x1x4x256xf32>
    %34 = vector.shape_cast %33 : vector<1x1x4x256xf32> to vector<4x256xf32>
    %35 = vector.shape_cast %26 : vector<4x256xf32> to vector<1x1x4x256xf32>
    tpu.vector_store %arg6[%c0_18, %c0_19, %c0_20, %c0_21], %35 {strides = array<i32>} : memref<1x1x4x256xf32, #tpu.memory_space<vmem>>, vector<1x1x4x256xf32>,
    return
  }
  func.func @transform_0(%arg0: i32, %arg1: i32) -> (i32, i32, i32) {
    %c0_i32 = arith.constant 0 : i32
    %c0_i32_0 = arith.constant 0 : i32
    return %arg0, %c0_i32, %arg1 : i32, i32, i32
  }
  func.func @transform_1(%arg0: i32, %arg1: i32) -> (i32, i32, i32) {
    %c0_i32 = arith.constant 0 : i32
    %c0_i32_0 = arith.constant 0 : i32
    return %arg0, %c0_i32, %arg1 : i32, i32, i32
  }
  func.func @transform_2(%arg0: i32, %arg1: i32) -> (i32, i32, i32, i32) {
    %c0_i32 = arith.constant 0 : i32
    %c0_i32_0 = arith.constant 0 : i32
    %c0_i32_1 = arith.constant 0 : i32
    return %arg0, %arg1, %c0_i32, %c0_i32_0 : i32, i32, i32, i32
  }
  func.func @transform_3(%arg0: i32, %arg1: i32) -> (i32, i32, i32, i32) {
    %c0_i32 = arith.constant 0 : i32
    %c0_i32_0 = arith.constant 0 : i32
    %c0_i32_1 = arith.constant 0 : i32
    return %arg0, %arg1, %c0_i32, %c0_i32_0 : i32, i32, i32, i32
  }
  func.func @transform_4(%arg0: i32, %arg1: i32) -> (i32, i32, i32, i32) {
    %c0_i32 = arith.constant 0 : i32
    %c0_i32_0 = arith.constant 0 : i32
    %c0_i32_1 = arith.constant 0 : i32
    return %arg0, %arg1, %c0_i32, %c0_i32_0 : i32, i32, i32, i32
  }
}

</mosaic_0001>

<llo_original>
// kernel: tpu_custom_call.1
$region0: #{tpu_custom_call.1}
  #allocation0 [shape = 'u32[]', space=smem, size = 0x4, offset = 0x4, fixed_abs, tag = 'smem constant byte address 0x4 - core index']
  #allocation1 [shape = 'u32[144,128]{1,0:T(1,128)}', space=vmem, size = 0x12000, scoped, tag = 'internal scratch']
  %s0 = inlined_call_operand.hbm [shape: f32[2,4,256], index: 0, kind: input, shape index: {}]
  %s1 = inlined_call_operand.hbm [shape: s32[2,1,256], index: 1, kind: input, shape index: {}]
  %s2 = inlined_call_operand.hbm [shape: f32[2,1,4,256], index: 2, kind: output, shape index: {0}]
  %s3 = inlined_call_operand.hbm [shape: f32[2,1,4,256], index: 3, kind: output, shape index: {1}]
  %s4 = inlined_call_operand.hbm [shape: f32[2,1,4,256], index: 4, kind: output, shape index: {2}]
  %5 = xla_tuple %s2, %s3, %s4
  %s6 = sld [smem:[#allocation0]]
  $region65: #{tpu_custom_call.1} parent=0
    _
  %s8 = ssub.s32 1, %s6
  %s9 = scalar_select 0, %s8, %s6
  $region1: #{tpu_custom_call.1} parent=0
    #allocation2 [shape = 'u8[8192]{0}', space=vmem, size = 0x2000, scoped, tag = 'input window, operand 0']
    #allocation3 [shape = 's32[2]{0}', space=sflag, size = 0x8, scoped, tag = 'scoped memory for tpu_custom_call.1']
    #allocation4 [shape = 's32[2]{0}', space=sflag, size = 0x8, scoped, tag = 'scoped memory for tpu_custom_call.1']
    #allocation5 [shape = 'u8[2048]{0}', space=vmem, size = 0x800, scoped, tag = 'input window, operand 1']
    #allocation6 [shape = 's32[2]{0}', space=sflag, size = 0x8, scoped, tag = 'scoped memory for tpu_custom_call.1']
    #allocation7 [shape = 'u8[8192]{0}', space=vmem, size = 0x2000, scoped, tag = 'output window, operand 0']
    #allocation8 [shape = 'u8[8192]{0}', space=vmem, size = 0x2000, scoped, tag = 'output window, operand 1']
    #allocation9 [shape = 's32[2]{0}', space=sflag, size = 0x8, scoped, tag = 'scoped memory for tpu_custom_call.1']
    #allocation10 [shape = 'u8[8192]{0}', space=vmem, size = 0x2000, scoped, tag = 'output window, operand 2']
    %10 = vsyncpa [#allocation3], 0
    %s11 = scalar_lea.sflag [#allocation3], 1
    %12 = vsyncpa %s11, 0
    %13 = vsyncpa [#allocation6], 0
    %s14 = scalar_lea.sflag [#allocation6], 1
    %15 = vsyncpa %s14, 0
    %16 = vsyncpa [#allocation4], 0
    %s17 = scalar_lea.sflag [#allocation4], 1
    %18 = vsyncpa %s17, 0
    %19 = vsyncpa [#allocation9], 0
    %s20 = scalar_lea.sflag [#allocation9], 1
    %21 = vsyncpa %s20, 0
    loop: start=0, step=1, limit=4
    $region2: #{tpu_custom_call.1} parent=1 // loop_pre_header
      _
    $region3: #{tpu_custom_call.1} parent=1 // loop_header
      %s23 = sphi 0, %s27
      %p24 = scmp.ge.s32.totalorder %s23, 4
      %s30 = sphi 0, %s42
      %s31 = sphi 0, %s38
      %s32 = sphi 0, %s30
      %s33 = sphi 0, %s31
      %s34 = sphi 0, %s32
      %s35 = sphi 0, %s33
      %s47 = sphi 0, %s49
      %s50 = sphi 0, %s47
      %s51 = sphi 0, %s50
      %s67 = sphi 0, %s51
      %s75 = sphi 0, %s77
      %s78 = sphi 0, %s75
      %s79 = sphi 0, %s78
      %s95 = sphi 0, %s79
      %s103 = sphi 0, %s105
      %s106 = sphi 0, %s103
      %s107 = sphi 0, %s106
      %s123 = sphi 0, %s107
      %s131 = sphi 0, %s133
      %s134 = sphi 0, %s131
      %s135 = sphi 0, %s134
      %s151 = sphi 0, %s135
      %s159 = sphi 0, %s161
      %s162 = sphi 0, %s159
      %s163 = sphi 0, %s162
      %s179 = sphi 0, %s163
    $region4: #{tpu_custom_call.1} parent=1 // loop_header_branch
      %26 = sbr.rel (%p24) target = $region8
    $region5: #{tpu_custom_call.1} parent=1 // loop_body
      %s28 = ssub.s32 %s23, 1
      %s29 = ssub.s32 %s23, 2
      %s36 = sadd.s32 1, %s31
      %p37 = scmp.ge.s32.totalorder %s36, 1
      %s38 = scalar_select %p37, 0, %s36
      %s39 = sadd.s32 1, %s30
      %s40 = scalar_select %p37, %s39, %s30
      %p41 = scmp.ge.s32.totalorder %s40, 2
      %s42 = scalar_select %p41, 0, %s40
      %s43 = ssub.s32 %s30, %s42
      %s44 = ssub.s32 %s31, %s38
      %s45 = sor.u32 %s43, %s44
      %p46 = scmp.eq.s32.totalorder %s45, 0
      %s48 = sadd.s32 %s47, 1
      %s49 = scalar_select %p46, %s47, %s48
      %p52 = pneg %p46
      %p53 = scmp.eq.s32.totalorder %s23, 1
      %p54 = por %p52, %p53
      %p55 = scmp.ne.s32.totalorder %s47, %s50
      %p56 = scmp.eq.s32.totalorder %s23, 0
      %p57 = por %p55, %p56
      %p58 = scmp.ne.s32.totalorder %s47, %s50
      %p59 = scmp.eq.s32.totalorder %s28, 1
      %p60 = por %p58, %p59
      %p61 = scmp.ne.s32.totalorder %s50, %s51
      %p62 = scmp.eq.s32.totalorder %s28, 0
      %p63 = por %p61, %p62
      %p64 = scmp.ne.s32.totalorder %s50, %s51
      %p65 = scmp.eq.s32.totalorder %s29, 1
      %p66 = por %p64, %p65
      %p68 = scmp.ne.s32.totalorder %s51, %s67
      %p69 = scmp.eq.s32.totalorder %s29, 0
      %p70 = por %p68, %p69
      %s71 = ssub.s32 %s30, %s42
      %s72 = ssub.s32 %s31, %s38
      %s73 = sor.u32 %s71, %s72
      %p74 = scmp.eq.s32.totalorder %s73, 0
      %s76 = sadd.s32 %s75, 1
      %s77 = scalar_select %p74, %s75, %s76
      %p80 = pneg %p74
      %p81 = scmp.eq.s32.totalorder %s23, 1
      %p82 = por %p80, %p81
      %p83 = scmp.ne.s32.totalorder %s75, %s78
      %p84 = scmp.eq.s32.totalorder %s23, 0
      %p85 = por %p83, %p84
      %p86 = scmp.ne.s32.totalorder %s75, %s78
      %p87 = scmp.eq.s32.totalorder %s28, 1
      %p88 = por %p86, %p87
      %p89 = scmp.ne.s32.totalorder %s78, %s79
      %p90 = scmp.eq.s32.totalorder %s28, 0
      %p91 = por %p89, %p90
      %p92 = scmp.ne.s32.totalorder %s78, %s79
      %p93 = scmp.eq.s32.totalorder %s29, 1
      %p94 = por %p92, %p93
      %p96 = scmp.ne.s32.totalorder %s79, %s95
      %p97 = scmp.eq.s32.totalorder %s29, 0
      %p98 = por %p96, %p97
      %s99 = ssub.s32 %s30, %s42
      %s100 = ssub.s32 %s31, %s38
      %s101 = sor.u32 %s99, %s100
      %p102 = scmp.eq.s32.totalorder %s101, 0
      %s104 = sadd.s32 %s103, 1
      %s105 = scalar_select %p102, %s103, %s104
      %p108 = pneg %p102
      %p109 = scmp.eq.s32.totalorder %s23, 1
      %p110 = por %p108, %p109
      %p111 = scmp.ne.s32.totalorder %s103, %s106
      %p112 = scmp.eq.s32.totalorder %s23, 0
      %p113 = por %p111, %p112
      %p114 = scmp.ne.s32.totalorder %s103, %s106
      %p115 = scmp.eq.s32.totalorder %s28, 1
      %p116 = por %p114, %p115
      %p117 = scmp.ne.s32.totalorder %s106, %s107
      %p118 = scmp.eq.s32.totalorder %s28, 0
      %p119 = por %p117, %p118
      %p120 = scmp.ne.s32.totalorder %s106, %s107
      %p121 = scmp.eq.s32.totalorder %s29, 1
      %p122 = por %p120, %p121
      %p124 = scmp.ne.s32.totalorder %s107, %s123
      %p125 = scmp.eq.s32.totalorder %s29, 0
      %p126 = por %p124, %p125
      %s127 = ssub.s32 %s30, %s42
      %s128 = ssub.s32 %s31, %s38
      %s129 = sor.u32 %s127, %s128
      %p130 = scmp.eq.s32.totalorder %s129, 0
      %s132 = sadd.s32 %s131, 1
      %s133 = scalar_select %p130, %s131, %s132
      %p136 = pneg %p130
      %p137 = scmp.eq.s32.totalorder %s23, 1
      %p138 = por %p136, %p137
      %p139 = scmp.ne.s32.totalorder %s131, %s134
      %p140 = scmp.eq.s32.totalorder %s23, 0
      %p141 = por %p139, %p140
      %p142 = scmp.ne.s32.totalorder %s131, %s134
      %p143 = scmp.eq.s32.totalorder %s28, 1
      %p144 = por %p142, %p143
      %p145 = scmp.ne.s32.totalorder %s134, %s135
      %p146 = scmp.eq.s32.totalorder %s28, 0
      %p147 = por %p145, %p146
      %p148 = scmp.ne.s32.totalorder %s134, %s135
      %p149 = scmp.eq.s32.totalorder %s29, 1
      %p150 = por %p148, %p149
      %p152 = scmp.ne.s32.totalorder %s135, %s151
      %p153 = scmp.eq.s32.totalorder %s29, 0
      %p154 = por %p152, %p153
      %s155 = ssub.s32 %s30, %s42
      %s156 = ssub.s32 %s31, %s38
      %s157 = sor.u32 %s155, %s156
      %p158 = scmp.eq.s32.totalorder %s157, 0
      %s160 = sadd.s32 %s159, 1
      %s161 = scalar_select %p158, %s159, %s160
      %p164 = pneg %p158
      %p165 = scmp.eq.s32.totalorder %s23, 1
      %p166 = por %p164, %p165
      %p167 = scmp.ne.s32.totalorder %s159, %s162
      %p168 = scmp.eq.s32.totalorder %s23, 0
      %p169 = por %p167, %p168
      %p170 = scmp.ne.s32.totalorder %s159, %s162
      %p171 = scmp.eq.s32.totalorder %s28, 1
      %p172 = por %p170, %p171
      %p173 = scmp.ne.s32.totalorder %s162, %s163
      %p174 = scmp.eq.s32.totalorder %s28, 0
      %p175 = por %p173, %p174
      %p176 = scmp.ne.s32.totalorder %s162, %s163
      %p177 = scmp.eq.s32.totalorder %s29, 1
      %p178 = por %p176, %p177
      %p180 = scmp.ne.s32.totalorder %s163, %s179
      %p181 = scmp.eq.s32.totalorder %s29, 0
      %p182 = por %p180, %p181
      %p183 = scmp.le.s32.totalorder 1, %s23
      %p184 = scmp.lt.s32.totalorder %s23, 3
      %p185 = pnand %p183, %p184
      %p186 = pneg %p185
      // Predicated region
      $region9: #{tpu_custom_call.1} parent=5 // pred_check
        _
      $region10: #{tpu_custom_call.1} parent=5 // pred_check_branch
        %188 = sbr.rel (%p185) target = $region12
      $region11: #{tpu_custom_call.1} parent=5 // pred_region
        %s189 = ssub.s32 %s23, 1
      $region12: #{tpu_custom_call.1} parent=5 // pred_fallthru
        _
      %p190 = scmp.lt.s32.totalorder %s23, 2
      // Predicated region
      $region13: #{tpu_custom_call.1} parent=5 // pred_check
        %p191 = pneg %p190
      $region14: #{tpu_custom_call.1} parent=5 // pred_check_branch
        %193 = sbr.rel (%p191) target = $region16
      $region15: #{tpu_custom_call.1} parent=5 // pred_region
        // Predicated region
        $region17: #{tpu_custom_call.1} parent=15 // pred_check
          %p194 = pneg %p57
        $region18: #{tpu_custom_call.1} parent=15 // pred_check_branch
          %196 = sbr.rel (%p194) target = $region20
        $region19: #{tpu_custom_call.1} parent=15 // pred_region
          %s197 = sand.u32 %s47, 1
          %s198 = scalar_lea.sflag [#allocation3], %s197
          %s199 = sand.u32 %s47, 1
          %s200 = smul.addr %s199, 8
          %s201 = scalar_lea.vmem [#allocation2], %s200
          %s202 = smul.u32 2, %s31
          %s204 = ssub.s32 128, 128
          %205 = vsyncadd %s198, %s204
          %s206 = smul.addr %s30, 2
          %s207 = sadd.s32 %s202, %s206
          %s208 = smul.addr %s207, 64
          %s209 = scalar_lea.hbm %s0, %s208
          %s211 = sshll.u32 %s201, 4
          %s212 = int_to_ptr.vmem [resolvable:$true] %s211
          %214 = dma.hbm_to_vmem [thread:$0]  %s209, 128, %s212, %s198
        $region20: #{tpu_custom_call.1} parent=15 // pred_fallthru
          _
        // Predicated region
        $region21: #{tpu_custom_call.1} parent=15 // pred_check
          %p215 = pneg %p85
        $region22: #{tpu_custom_call.1} parent=15 // pred_check_branch
          %217 = sbr.rel (%p215) target = $region24
        $region23: #{tpu_custom_call.1} parent=15 // pred_region
          %s218 = sand.u32 %s75, 1
          %s219 = scalar_lea.sflag [#allocation6], %s218
          %s220 = sand.u32 %s75, 1
          %s221 = smul.addr %s220, 2
          %s222 = scalar_lea.vmem [#allocation5], %s221
          %s223 = smul.u32 2, %s31
          %s225 = ssub.s32 32, 32
          %226 = vsyncadd %s219, %s225
          %s227 = smul.addr %s30, 2
          %s228 = sadd.s32 %s223, %s227
          %s229 = smul.addr %s228, 16
          %s230 = scalar_lea.hbm %s1, %s229
          %s232 = sshll.u32 %s222, 4
          %s233 = int_to_ptr.vmem [resolvable:$true] %s232
          %235 = dma.hbm_to_vmem [thread:$0]  %s230, 32, %s233, %s219
        $region24: #{tpu_custom_call.1} parent=15 // pred_fallthru
          _
      $region16: #{tpu_custom_call.1} parent=5 // pred_fallthru
        _
      %p236 = scmp.le.s32.totalorder 1, %s23
      %p237 = scmp.lt.s32.totalorder %s23, 3
      %p238 = pnand %p236, %p237
      %p239 = pneg %p238
      // Predicated region
      $region25: #{tpu_custom_call.1} parent=5 // pred_check
        _
      $region26: #{tpu_custom_call.1} parent=5 // pred_check_branch
        %241 = sbr.rel (%p238) target = $region28
      $region27: #{tpu_custom_call.1} parent=5 // pred_region
        %s242 = ssub.s32 %s23, 1
        %s243 = sand.u32 %s50, 1
        %s244 = scalar_lea.sflag [#allocation3], %s243
        %s245 = sand.u32 %s50, 1
        %s246 = smul.addr %s245, 8
        %s247 = scalar_lea.vmem [#allocation2], %s246
        // Predicated region
        $region29: #{tpu_custom_call.1} parent=27 // pred_check
          %p248 = pneg %p63
        $region30: #{tpu_custom_call.1} parent=27 // pred_check_branch
          %250 = sbr.rel (%p248) target = $region32
        $region31: #{tpu_custom_call.1} parent=27 // pred_region
          %251 = dma.done %s244, 128
        $region32: #{tpu_custom_call.1} parent=27 // pred_fallthru
          _
        %s252 = sand.u32 %s78, 1
        %s253 = scalar_lea.sflag [#allocation6], %s252
        %s254 = sand.u32 %s78, 1
        %s255 = smul.addr %s254, 2
        %s256 = scalar_lea.vmem [#allocation5], %s255
        // Predicated region
        $region33: #{tpu_custom_call.1} parent=27 // pred_check
          %p257 = pneg %p91
        $region34: #{tpu_custom_call.1} parent=27 // pred_check_branch
          %259 = sbr.rel (%p257) target = $region36
        $region35: #{tpu_custom_call.1} parent=27 // pred_region
          %260 = dma.done %s253, 32
        $region36: #{tpu_custom_call.1} parent=27 // pred_fallthru
          _
        %s261 = sand.u32 %s50, 1
        %s262 = scalar_lea.sflag [#allocation3], %s261
        %s263 = sand.u32 %s50, 1
        %s264 = smul.addr %s263, 8
        %s265 = scalar_lea.vmem [#allocation2], %s264
        %p266 = pneg %p63
        %p267 = pneg %p60
        %s268 = sand.u32 %s78, 1
        %s269 = scalar_lea.sflag [#allocation6], %s268
        %s270 = sand.u32 %s78, 1
        %s271 = smul.addr %s270, 2
        %s272 = scalar_lea.vmem [#allocation5], %s271
        %p273 = pneg %p91
        %p274 = pneg %p88
        %p275 = pneg %p119
        %p276 = pneg %p116
        %s277 = sand.u32 %s106, 1
        %s278 = scalar_lea.sflag [#allocation4], %s277
        %s279 = sand.u32 %s106, 1
        %s280 = smul.addr %s279, 8
        %s281 = scalar_lea.vmem [#allocation7], %s280
        %p282 = pneg %p147
        %p283 = pneg %p144
        %s284 = sand.u32 %s28, 1
        %s285 = scalar_lea.sflag [#allocation9], %s284
        %s286 = sand.u32 %s134, 1
        %s287 = smul.addr %s286, 8
        %s288 = scalar_lea.vmem [#allocation8], %s287
        %p289 = pneg %p175
        %p290 = pneg %p172
        %s291 = sand.u32 %s28, 1
        %s292 = scalar_lea.sflag [#allocation9], %s291
        %s293 = sand.u32 %s162, 1
        %s294 = smul.addr %s293, 8
        %s295 = scalar_lea.vmem [#allocation10], %s294
        %s296 = smul.u32 2, %s33
        %s297 = smul.u32 2, %s33
        %v298 = vlaneseq
        %v299 = vshrl.u32 %v298, 7
        %v300 = vld [vmem:[%s247] sm:$0xff]
        %v301 = vld [vmem:[%s256] sm:$0x3]
        %v303 = vcombine.high %v300, %v300
        %vm305 = vcmask 1043456
        %v306 = vsel %vm305, %v300, -inf
        %v307 = vrot.slane %v306, 4
        %v308 = vmax.f32 %v306, %v307
        %v309 = vrot.slane %v308, 2
        %v310 = vmax.f32 %v308, %v309
        %v311 = vrot.slane %v310, 1
        %v312 = vmax.f32 %v310, %v311
        %v313 = vsel %vm305, %v303, -inf
        %v314 = vrot.slane %v313, 4
        %v315 = vmax.f32 %v313, %v314
        %v316 = vrot.slane %v315, 2
        %v317 = vmax.f32 %v315, %v316
        %v318 = vrot.slane %v317, 1
        %v319 = vmax.f32 %v317, %v318
        %v322 = vcombine.low %v312, %v319
        %v324 = vsub.f32 %v300, %v322
        %v325 = vmul.f32 %v324, 1.442695
        %v326 = vpow.pop %v325
        %v328 = vcombine.high %v326, %v326
        %v330 = vsel %vm305, %v326, 0.0
        %v331 = vrot.slane %v330, 4
        %v332 = vadd.f32 %v330, %v331
        %v333 = vrot.slane %v332, 2
        %v334 = vadd.f32 %v332, %v333
        %v335 = vrot.slane %v334, 1
        %v336 = vadd.f32 %v334, %v335
        %v337 = vsel %vm305, %v328, 0.0
        %v338 = vrot.slane %v337, 4
        %v339 = vadd.f32 %v337, %v338
        %v340 = vrot.slane %v339, 2
        %v341 = vadd.f32 %v339, %v340
        %v342 = vrot.slane %v341, 1
        %v343 = vadd.f32 %v341, %v342
        %v344 = vrcp.pop %v336
        %v345 = vrcp.pop %v343
        %v348 = vcombine.low %v344, %v345
        %v350 = vmul.f32 %v326, %v348
        %v351 = vlaneseq
        %v352 = vshrl.u32 %v351, 7
        %v353 = vsub.s32 0, %v352
        %v354 = vrot.slane %v301, %v353
        %v355 = vlaneseq
        %v356 = vshrl.u32 %v355, 7
        %v357 = vsub.s32 1, %v356
        %v358 = vrot.slane %v301, %v357
        %vm359 = vcmp.eq.s32.totalorder %v354, %v299
        %vm360 = vcmp.eq.s32.totalorder %v358, %v299
        %v362 = vcombine.high %v350, %v350
        %v364 = vsel %vm359, %v350, 0.0
        %v365 = vsel %vm360, %v362, 0.0
        %v366 = vadd.f32 %v364, 0.0
        %v367 = vadd.f32 %v365, 0.0
        %v368 = vmul.f32 %v350, %v350
        %v369 = vadd.f32 %v368, 0.0
        %v370 = vsel %vm359, 1.0, 0.0
        %v371 = vsel %vm360, 1.0, 0.0
        %v372 = vadd.f32 %v370, 0.0
        %v373 = vadd.f32 %v371, 0.0
        %v376 = vcombine.low %v366, %v367
        %378 = vst [vmem:[%s281] sm:$0xff] %v376
        %379 = vst [vmem:[%s288] sm:$0xff] %v369
        %v382 = vcombine.low %v372, %v373
        %384 = vst [vmem:[%s295] sm:$0xff] %v382
        %s385 = sand.u32 %s106, 1
        %s386 = scalar_lea.sflag [#allocation4], %s385
        %s387 = sand.u32 %s106, 1
        %s388 = smul.addr %s387, 8
        %s389 = scalar_lea.vmem [#allocation7], %s388
        %s390 = sand.u32 %s28, 1
        %s391 = scalar_lea.sflag [#allocation9], %s390
        %s392 = sand.u32 %s134, 1
        %s393 = smul.addr %s392, 8
        %s394 = scalar_lea.vmem [#allocation8], %s393
        %s395 = sand.u32 %s28, 1
        %s396 = scalar_lea.sflag [#allocation9], %s395
        %s397 = sand.u32 %s162, 1
        %s398 = smul.addr %s397, 8
        %s399 = scalar_lea.vmem [#allocation10], %s398
        // Predicated region
        $region37: #{tpu_custom_call.1} parent=27 // pred_check
          %p400 = pneg %p116
        $region38: #{tpu_custom_call.1} parent=27 // pred_check_branch
          %402 = sbr.rel (%p400) target = $region40
        $region39: #{tpu_custom_call.1} parent=27 // pred_region
          %s404 = ssub.s32 128, 128
          %405 = vsyncadd %s386, %s404
          %s406 = smul.addr %s33, 2
          %s407 = smul.addr %s32, 2
          %s408 = sadd.s32 %s406, %s407
          %s409 = smul.addr %s408, 64
          %s410 = scalar_lea.hbm %s2, %s409
          %s412 = sshll.u32 %s389, 4
          %s413 = int_to_ptr.vmem [resolvable:$true] %s412
          %415 = dma.vmem_to_hbm [thread:$0]  %s413, 128, %s410, %s386
        $region40: #{tpu_custom_call.1} parent=27 // pred_fallthru
          _
        // Predicated region
        $region41: #{tpu_custom_call.1} parent=27 // pred_check
          %p416 = pneg %p144
        $region42: #{tpu_custom_call.1} parent=27 // pred_check_branch
          %418 = sbr.rel (%p416) target = $region44
        $region43: #{tpu_custom_call.1} parent=27 // pred_region
          %s420 = ssub.s32 128, 128
          %421 = vsyncadd %s391, %s420
          %s422 = smul.addr %s33, 2
          %s423 = smul.addr %s32, 2
          %s424 = sadd.s32 %s422, %s423
          %s425 = smul.addr %s424, 64
          %s426 = scalar_lea.hbm %s3, %s425
          %s428 = sshll.u32 %s394, 4
          %s429 = int_to_ptr.vmem [resolvable:$true] %s428
          %431 = dma.vmem_to_hbm [thread:$0]  %s429, 128, %s426, %s391
        $region44: #{tpu_custom_call.1} parent=27 // pred_fallthru
          _
        // Predicated region
        $region45: #{tpu_custom_call.1} parent=27 // pred_check
          %p432 = pneg %p172
        $region46: #{tpu_custom_call.1} parent=27 // pred_check_branch
          %434 = sbr.rel (%p432) target = $region48
        $region47: #{tpu_custom_call.1} parent=27 // pred_region
          %s436 = ssub.s32 128, 128
          %437 = vsyncadd %s396, %s436
          %s438 = smul.addr %s33, 2
          %s439 = smul.addr %s32, 2
          %s440 = sadd.s32 %s438, %s439
          %s441 = smul.addr %s440, 64
          %s442 = scalar_lea.hbm %s4, %s441
          %s444 = sshll.u32 %s399, 4
          %s445 = int_to_ptr.vmem [resolvable:$true] %s444
          %447 = dma.vmem_to_hbm [thread:$0]  %s445, 128, %s442, %s396
        $region48: #{tpu_custom_call.1} parent=27 // pred_fallthru
          _
      $region28: #{tpu_custom_call.1} parent=5 // pred_fallthru
        _
      %p448 = scmp.le.s32.totalorder 2, %s23
      // Predicated region
      $region49: #{tpu_custom_call.1} parent=5 // pred_check
        %p449 = pneg %p448
      $region50: #{tpu_custom_call.1} parent=5 // pred_check_branch
        %451 = sbr.rel (%p449) target = $region52
      $region51: #{tpu_custom_call.1} parent=5 // pred_region
        %s452 = ssub.s32 %s23, 2
        // Predicated region
        $region53: #{tpu_custom_call.1} parent=51 // pred_check
          %p453 = pneg %p122
        $region54: #{tpu_custom_call.1} parent=51 // pred_check_branch
          %455 = sbr.rel (%p453) target = $region56
        $region55: #{tpu_custom_call.1} parent=51 // pred_region
          %s456 = sand.u32 %s107, 1
          %s457 = scalar_lea.sflag [#allocation4], %s456
          %s458 = sand.u32 %s107, 1
          %s459 = smul.addr %s458, 8
          %s460 = scalar_lea.vmem [#allocation7], %s459
          %461 = dma.done %s457, 128
        $region56: #{tpu_custom_call.1} parent=51 // pred_fallthru
          _
        // Predicated region
        $region57: #{tpu_custom_call.1} parent=51 // pred_check
          %p462 = pneg %p150
        $region58: #{tpu_custom_call.1} parent=51 // pred_check_branch
          %464 = sbr.rel (%p462) target = $region60
        $region59: #{tpu_custom_call.1} parent=51 // pred_region
          %s465 = sand.u32 %s29, 1
          %s466 = scalar_lea.sflag [#allocation9], %s465
          %s467 = sand.u32 %s135, 1
          %s468 = smul.addr %s467, 8
          %s469 = scalar_lea.vmem [#allocation8], %s468
          %470 = dma.done %s466, 128
        $region60: #{tpu_custom_call.1} parent=51 // pred_fallthru
          _
        // Predicated region
        $region61: #{tpu_custom_call.1} parent=51 // pred_check
          %p471 = pneg %p178
        $region62: #{tpu_custom_call.1} parent=51 // pred_check_branch
          %473 = sbr.rel (%p471) target = $region64
        $region63: #{tpu_custom_call.1} parent=51 // pred_region
          %s474 = sand.u32 %s29, 1
          %s475 = scalar_lea.sflag [#allocation9], %s474
          %s476 = sand.u32 %s163, 1
          %s477 = smul.addr %s476, 8
          %s478 = scalar_lea.vmem [#allocation10], %s477
          %479 = dma.done %s475, 128
        $region64: #{tpu_custom_call.1} parent=51 // pred_fallthru
          _
      $region52: #{tpu_custom_call.1} parent=5 // pred_fallthru
        _
    $region6: #{tpu_custom_call.1} parent=1 // loop_footer
      %s27 = sadd.s32 1, %s23
    $region7: #{tpu_custom_call.1} parent=1 // loop_footer_branch
      %22 = sbr.rel target = $region3
    $region8: #{tpu_custom_call.1} parent=1 // loop_exit
      _
    %480 = vsyncpa [#allocation3], 1
    %s481 = scalar_lea.sflag [#allocation3], 1
    %482 = vsyncpa %s481, 1
    %483 = vsyncpa [#allocation6], 1
    %s484 = scalar_lea.sflag [#allocation6], 1
    %485 = vsyncpa %s484, 1
    %486 = vsyncpa [#allocation4], 1
    %s487 = scalar_lea.sflag [#allocation4], 1
    %488 = vsyncpa %s487, 1
    %489 = vsyncpa [#allocation9], 1
    %s490 = scalar_lea.sflag [#allocation9], 1
    %491 = vsyncpa %s490, 1

</llo_original>
